<compile_context>
chip_gen: v7x
topology: tpu7x:2x2x1
jax: 0.10.0
libtpu: 0.0.40
codegen_flags: <defaults>
</compile_context>

<pallas_src>
import numpy as np
import jax
import jax.numpy as jnp
from jax.experimental import pallas as pl
from jax.experimental.pallas import tpu as pltpu


# ----------------------------------------------------------------------------
# Index setup (plain numpy glue, mirrors the PyTorch __init__)
# ----------------------------------------------------------------------------
def adjust_indices(indices, arr_size1, arr_size2):
    """Port of the PyTorch adjust_indices. `indices` is the row-swapped (2, nnz)
    array (tmp2 in the PyTorch code). Returns (2, nnz*arr_size1*arr_size2)."""
    rows, cols = [], []
    for k in range(indices.shape[1]):
        t0 = int(indices[0, k])
        t1 = int(indices[1, k])
        for i in range(arr_size1):
            for j in range(arr_size2):
                rows.append(t0 * arr_size2 + j)
                cols.append(t1 * arr_size1 + i)
    return np.array([rows, cols], dtype=np.int32)


def _round_up(x, m):
    return ((x + m - 1) // m) * m


# ----------------------------------------------------------------------------
# Pallas kernel: block-sparse (B, K) @ (K, N) + bias, f32 accumulation in o_ref
# ----------------------------------------------------------------------------
def _spmm_bias_kernel(kblk_ref, kcnt_ref, x_ref, w_ref, b_ref, o_ref):
    j = pl.program_id(1)
    k = pl.program_id(2)

    @pl.when(k == 0)
    def _init():
        # bias written exactly once per output tile (output stays resident over k)
        o_ref[...] = jnp.broadcast_to(b_ref[...], o_ref.shape).astype(o_ref.dtype)

    @pl.when(k < kcnt_ref[j])
    def _acc():
        o_ref[...] += jnp.dot(
            x_ref[...], w_ref[...], preferred_element_type=jnp.float32
        )


# ----------------------------------------------------------------------------
# Module wrapper: all weight-side preprocessing is done once, at construction.
# ----------------------------------------------------------------------------
class SparsePoolerTPU:
    def __init__(self, w_t, b, *, dtype=jnp.bfloat16,
                 tm_cap=256, tn_cap=256, tk_cap=512):
        w_t = np.asarray(w_t, dtype=np.float32)      # (size1, size2) == dense(A).T
        b = np.asarray(b, dtype=np.float32)          # (size2,)
        self.size1, self.size2 = w_t.shape
        self.dtype = dtype
        self.sublane = 16 if dtype == jnp.bfloat16 else 8
        self.itemsize = 2 if dtype == jnp.bfloat16 else 4
        self.tm_cap = _round_up(tm_cap, self.sublane)

        Kp = _round_up(self.size1, 128)
        Np = _round_up(self.size2, 128)
        tk = self._pick_tile(Kp, tk_cap)
        tn = self._pick_tile(Np, tn_cap, prefer_multi=True)  # >=2 N blocks for v7x megacore
        self.Kp, self.Np, self.tk, self.tn = Kp, Np, tk, tn

        # --- hoisted: pad + cast the weight / bias exactly once -------------
        wp = np.zeros((Kp, Np), np.float32)
        wp[: self.size1, : self.size2] = w_t
        bp = np.zeros((1, Np), np.float32)
        bp[0, : self.size2] = b

        # --- block-sparsity tables: nonzero (tk x tn) K-blocks per N-block ---
        gk, gn = Kp // tk, Np // tn
        blk_nz = np.zeros((gk, gn), dtype=bool)
        for kk in range(gk):
            for jj in range(gn):
                blk_nz[kk, jj] = np.any(
                    wp[kk * tk:(kk + 1) * tk, jj * tn:(jj + 1) * tn] != 0.0)
        counts = blk_nz.sum(axis=0).astype(np.int32)            # (gn,)
        kmax = max(1, int(counts.max()))
        kblocks = np.zeros((gn, kmax), np.int32)
        for jj in range(gn):
            nz = np.nonzero(blk_nz[:, jj])[0].astype(np.int32)
            if nz.size:
                kblocks[jj, : nz.size] = nz
                kblocks[jj, nz.size:] = nz[-1]   # repeat last -> no extra DMA; compute skipped
        self.kmax = kmax
        self.nnz_blocks = int(counts.sum())

        self.wp = jnp.asarray(wp, dtype=dtype)
        self.bp = jnp.asarray(bp)                  # f32, added once at k == 0
        self.kblocks = jnp.asarray(kblocks)
        self.kcounts = jnp.asarray(counts)

        self._fwd = jax.jit(self._forward)

    @staticmethod
    def _pick_tile(dim_p, cap, prefer_multi=False):
        # dim_p is a multiple of 128; pick a divisor (no double round-up padding)
        cands = [t for t in range(128, min(cap, dim_p) + 1, 128) if dim_p % t == 0]
        if not cands:
            return dim_p
        if prefer_multi:
            multi = [t for t in cands if dim_p // t >= 2]
            if multi:
                return max(multi)
        return max(cands)

    def _forward(self, x, wp, bp, kblocks, kcounts):
        B = x.shape[0]
        Kp, Np, tk, tn = self.Kp, self.Np, self.tk, self.tn

        Bp = _round_up(B, self.sublane)
        if Bp <= self.tm_cap:
            tm = Bp
        else:
            tm = self.tm_cap
            Bp = _round_up(Bp, tm)

        # only the (small) activation is padded/cast per call
        x2d = x.reshape(B, self.size1).astype(self.dtype)
        xp = jnp.zeros((Bp, Kp), self.dtype).at[:B, : self.size1].set(x2d)

        gm, gn, gk = Bp // tm, Np // tn, self.kmax

        nzb = max(self.nnz_blocks, 1)
        cost = pl.CostEstimate(
            flops=2 * tm * tn * tk * gm * nzb,
            transcendentals=0,
            bytes_accessed=(gm * nzb * (tm * tk + tk * tn) * self.itemsize
                            + gm * gn * tn * 4
                            + Bp * Np * 4),
        )

        out = pl.pallas_call(
            _spmm_bias_kernel,
            out_shape=jax.ShapeDtypeStruct((Bp, Np), jnp.float32),
            grid_spec=pltpu.PrefetchScalarGridSpec(
                num_scalar_prefetch=2,
                grid=(gm, gn, gk),
                in_specs=[
                    pl.BlockSpec((tm, tk), lambda i, j, k, kb, kc: (i, kb[j, k])),
                    pl.BlockSpec((tk, tn), lambda i, j, k, kb, kc: (kb[j, k], j)),
                    pl.BlockSpec((1, tn), lambda i, j, k, kb, kc: (0, j)),
                ],
                out_specs=pl.BlockSpec((tm, tn), lambda i, j, k, kb, kc: (i, j)),
            ),
            compiler_params=pltpu.CompilerParams(
                dimension_semantics=("parallel", "parallel", "arbitrary"),
                vmem_limit_bytes=32 * 1024 * 1024,
            ),
            cost_estimate=cost,
        )(kblocks, kcounts, xp, wp, bp)

        return out[:B, : self.size2].reshape(B, self.size2, 1)

    def __call__(self, x):
        return self._fwd(x, self.wp, self.bp, self.kblocks, self.kcounts)


# ----------------------------------------------------------------------------
# Main: deterministic synthetic params + small input, run kernel, verify
# ----------------------------------------------------------------------------
if __name__ == "__main__":
    key = jax.random.PRNGKey(0)
    arr_size1, arr_size2 = 4, 6

    # deterministic small COO graph; force max node indices so sizes are fixed
    nnz0 = 24
    src = np.array([(7 * k) % 40 for k in range(nnz0)] + [39], dtype=np.int32)
    dst = np.array([(11 * k) % 50 for k in range(nnz0)] + [49], dtype=np.int32)
    indices = np.stack([src, dst])                       # (2, 25)

    graph_size1 = int(indices[0].max()) + 1              # 40
    graph_size2 = int(indices[1].max()) + 1              # 50
    size1 = graph_size1 * arr_size1                      # 160
    size2 = graph_size2 * arr_size2                      # 300

    # __init__: swap rows (tmp2), then expand each edge into arr_size1*arr_size2 entries
    swapped = indices[[1, 0], :]
    adj = adjust_indices(swapped, arr_size1, arr_size2)  # (2, 600)
    nnz_expanded = adj.shape[1]

    kv, kb, kx = jax.random.split(key, 3)
    # values: final PyTorch init is torch.nn.init.uniform_ -> U[0, 1)
    values = np.asarray(jax.random.uniform(kv, (nnz_expanded,), dtype=jnp.float32))
    # b: uniform(-1/len(self.indices), 1/len(self.indices)) = uniform(-0.5, 0.5)
    b = np.asarray(jax.random.uniform(kb, (size2,), dtype=jnp.float32,
                                      minval=-0.5, maxval=0.5))

    # Densify the sparse (size2, size1) matrix; duplicate coords sum (scatter-add),
    # matching torch_sparse.spmm semantics.
    A = np.zeros((size2, size1), dtype=np.float32)
    np.add.at(A, (adj[0], adj[1]), values)
    W_T = np.ascontiguousarray(A.T)                      # (size1, size2)
    # Carve an all-zero (>= one 128x128 tile) region so the block-sparse skip
    # path (kcounts[j] < kmax) is actually exercised in the small-tile test.
    W_T[128:, :128] = 0.0
    A = W_T.T

    # forward input: (B, size1, 1)
    B = 24
    x = jax.random.normal(kx, (B, size1, 1), dtype=jnp.float32)
    b_j = jnp.asarray(b)

    # --- f32 verification path, default tiles -------------------------------
    pooler_f32 = SparsePoolerTPU(W_T, b, dtype=jnp.float32)
    out_f32 = jax.block_until_ready(pooler_f32(x))
    ref = jnp.einsum("mn,bnk->bmk", jnp.asarray(A), x) + b_j.reshape(1, size2, 1)
    assert out_f32.shape == (B, size2, 1)
    assert jnp.allclose(out_f32, ref, atol=1e-3, rtol=1e-3), "f32 kernel mismatch"

    # --- bf16 production path, small tiles: multi N-block, multi K-block grid,
    # uneven per-column nonzero K-block counts (exercises the pl.when skip) ----
    pooler_bf16 = SparsePoolerTPU(W_T, b, dtype=jnp.bfloat16,
                                  tn_cap=128, tk_cap=128)
    assert pooler_bf16.kmax >= 2 and int(pooler_bf16.kcounts.min()) < pooler_bf16.kmax
    out_bf16 = jax.block_until_ready(pooler_bf16(x))
    x_bf = x.astype(jnp.bfloat16).astype(jnp.float32)
    A_bf = jnp.asarray(A).astype(jnp.bfloat16).astype(jnp.float32)
    ref_bf = jnp.einsum("mn,bnk->bmk", A_bf, x_bf) + b_j.reshape(1, size2, 1)
    assert out_bf16.shape == (B, size2, 1)
    assert jnp.allclose(out_bf16, ref_bf, atol=2e-3, rtol=2e-3), "bf16 kernel mismatch"

    print("KERNEL_OK")
</pallas_src>

<mosaic_0001>
module attributes {stable_mosaic.version = 11 : i64} {
  func.func @_spmm_bias_kernel(%arg0: i32, %arg1: i32, %arg2: i32, %arg3: memref<3x1xi32, #tpu.memory_space<smem>>, %arg4: memref<3xi32, #tpu.memory_space<smem>>, %arg5: memref<24x256xf32, #tpu.memory_space<vmem>>, %arg6: memref<256x128xf32, #tpu.memory_space<vmem>>, %arg7: memref<1x128xf32, #tpu.memory_space<vmem>>, %arg8: memref<24x128xf32, #tpu.memory_space<vmem>>) attributes {dimension_semantics = [#tpu.dimension_semantics<parallel>, #tpu.dimension_semantics<parallel>, #tpu.dimension_semantics<arbitrary>], iteration_bounds = array<i64: 1, 3, 1>, scalar_prefetch = 2 : i64, scratch_operands = 0 : i64, tpu.core_type = #tpu.core_type<tc>, window_params = [{transform_indices = @transform_0, window_bounds = array<i64: 24, 256>}, {transform_indices = @transform_1, window_bounds = array<i64: 256, 128>}, {transform_indices = @transform_2, window_bounds = array<i64: 1, 128>}, {transform_indices = @transform_3, window_bounds = array<i64: 24, 128>}]} {
    %c0_i32 = arith.constant 0 : i32
    %0 = arith.cmpi eq, %arg2, %c0_i32 : i32
    %1 = arith.extui %0 : i1 to i32
    %c0_i32_0 = arith.constant 0 : i32
    %2 = arith.cmpi ne, %1, %c0_i32_0 : i32
    scf.if %2 {
      %c0 = arith.constant 0 : index
      %c0_2 = arith.constant 0 : index
      %8 = vector.load %arg7[%c0, %c0_2] : memref<1x128xf32, #tpu.memory_space<vmem>>, vector<1x128xf32>
      %9 = vector.shape_cast %8 : vector<1x128xf32> to vector<1x128xf32>
      %10 = vector.broadcast %9 : vector<1x128xf32> to vector<24x128xf32>
      %c0_3 = arith.constant 0 : index
      %c0_4 = arith.constant 0 : index
      %11 = vector.load %arg8[%c0_3, %c0_4] : memref<24x128xf32, #tpu.memory_space<vmem>>, vector<24x128xf32>
      tpu.vector_store %arg8[%c0_3, %c0_4], %10 {strides = array<i32>} : memref<24x128xf32, #tpu.memory_space<vmem>>, vector<24x128xf32>,
    } else {
    }
    %3 = arith.index_cast %arg1 : i32 to index
    %4 = memref.load %arg4[%3] : memref<3xi32, #tpu.memory_space<smem>>
    %5 = arith.cmpi slt, %arg2, %4 : i32
    %6 = arith.extui %5 : i1 to i32
    %c0_i32_1 = arith.constant 0 : i32
    %7 = arith.cmpi ne, %6, %c0_i32_1 : i32
    scf.if %7 {
      %c0 = arith.constant 0 : index
      %c0_2 = arith.constant 0 : index
      %8 = vector.load %arg8[%c0, %c0_2] : memref<24x128xf32, #tpu.memory_space<vmem>>, vector<24x128xf32>
      %c0_3 = arith.constant 0 : index
      %c0_4 = arith.constant 0 : index
      %9 = vector.load %arg5[%c0_3, %c0_4] : memref<24x256xf32, #tpu.memory_space<vmem>>, vector<24x256xf32>
      %c0_5 = arith.constant 0 : index
      %c0_6 = arith.constant 0 : index
      %10 = vector.load %arg6[%c0_5, %c0_6] : memref<256x128xf32, #tpu.memory_space<vmem>>, vector<256x128xf32>
      %cst = arith.constant dense<0.000000e+00> : vector<24x128xf32>
      %11 = tpu.matmul %9, %10, %cst {dimension_numbers = #tpu.dot_dimension_numbers<[1], [0], [0], [1], [0, 0, 1, 1], [], []>} : vector<24x256xf32>, vector<256x128xf32>, vector<24x128xf32> -> vector<24x128xf32>
      %12 = arith.addf %8, %11 : vector<24x128xf32>
      %c0_7 = arith.constant 0 : index
      %c0_8 = arith.constant 0 : index
      %13 = vector.load %arg8[%c0_7, %c0_8] : memref<24x128xf32, #tpu.memory_space<vmem>>, vector<24x128xf32>
      tpu.vector_store %arg8[%c0_7, %c0_8], %12 {strides = array<i32>} : memref<24x128xf32, #tpu.memory_space<vmem>>, vector<24x128xf32>,
    } else {
    }
    return
  }
  func.func @transform_0(%arg0: i32, %arg1: i32, %arg2: i32, %arg3: memref<3x1xi32, #tpu.memory_space<smem>>, %arg4: memref<3xi32, #tpu.memory_space<smem>>) -> (i32, i32) {
    %0 = arith.index_cast %arg1 : i32 to index
    %1 = arith.index_cast %arg2 : i32 to index
    %2 = memref.load %arg3[%0, %1] : memref<3x1xi32, #tpu.memory_space<smem>>
    %c0_i32 = arith.constant 0 : i32
    return %arg0, %2 : i32, i32
  }
  func.func @transform_1(%arg0: i32, %arg1: i32, %arg2: i32, %arg3: memref<3x1xi32, #tpu.memory_space<smem>>, %arg4: memref<3xi32, #tpu.memory_space<smem>>) -> (i32, i32) {
    %0 = arith.index_cast %arg1 : i32 to index
    %1 = arith.index_cast %arg2 : i32 to index
    %2 = memref.load %arg3[%0, %1] : memref<3x1xi32, #tpu.memory_space<smem>>
    %c0_i32 = arith.constant 0 : i32
    return %2, %arg1 : i32, i32
  }
  func.func @transform_2(%arg0: i32, %arg1: i32, %arg2: i32, %arg3: memref<3x1xi32, #tpu.memory_space<smem>>, %arg4: memref<3xi32, #tpu.memory_space<smem>>) -> (i32, i32) {
    %c0_i32 = arith.constant 0 : i32
    %c0_i32_0 = arith.constant 0 : i32
    return %c0_i32, %arg1 : i32, i32
  }
  func.func @transform_3(%arg0: i32, %arg1: i32, %arg2: i32, %arg3: memref<3x1xi32, #tpu.memory_space<smem>>, %arg4: memref<3xi32, #tpu.memory_space<smem>>) -> (i32, i32) {
    %c0_i32 = arith.constant 0 : i32
    return %arg0, %arg1 : i32, i32
  }
}

</mosaic_0001>

<llo_original>
// kernel: _forward.1
$region0: #{_forward.1}
  #allocation0 [shape = 'u32[]', space=smem, size = 0x4, offset = 0x4, fixed_abs, tag = 'smem constant byte address 0x4 - core index']
  #allocation1 [shape = 'u32[144,128]{1,0:T(1,128)}', space=vmem, size = 0x12000, scoped, tag = 'internal scratch']
  #allocation2 [shape = 's32[1]{0}', space=sflag, size = 0x4, scoped, tag = 'scoped memory for _forward.1']
  #allocation3 [shape = 'u8[2048]{0}', space=smem, size = 0x800, scoped, tag = 'prefetched SMEM operand 0']
  #allocation4 [shape = 'u8[512]{0}', space=smem, size = 0x200, scoped, tag = 'prefetched SMEM operand 1']
  %s0 = inlined_call_operand.vmem [shape: s32[3,1], index: 0, kind: input, shape index: {}]
  %s1 = inlined_call_operand.vmem [shape: s32[3], index: 1, kind: input, shape index: {}]
  %s2 = inlined_call_operand.vmem [shape: f32[24,256], index: 2, kind: input, shape index: {}]
  %s3 = inlined_call_operand.hbm [shape: f32[256,384], index: 3, kind: input, shape index: {}]
  %s4 = inlined_call_operand.vmem [shape: f32[1,384], index: 4, kind: input, shape index: {}]
  %s5 = inlined_call_operand.vmem [shape: f32[24,384], index: 5, kind: output, shape index: {}]
  %s6 = sld [smem:[#allocation0]]
  $region91: #{_forward.1} parent=0
    _
  %s8 = ssub.s32 1, %s6
  %s9 = scalar_select 0, %s8, %s6
  %s10 = sshll.u32 %s0, 4
  %s11 = int_to_ptr.vmem [resolvable:$true] %s10
  %13 = dma.vmem_to_smem %s11, 64, [#allocation3], [#allocation2]
  %s14 = sshll.u32 %s1, 4
  %s15 = int_to_ptr.vmem [resolvable:$true] %s14
  %17 = dma.vmem_to_smem %s15, 16, [#allocation4], [#allocation2]
  %18 = dma.done [#allocation2], 80
  %19 = sfence
  $region1: #{_forward.1} parent=0
    #allocation5 [shape = 'u8[262144]{0}', space=vmem, size = 0x40000, scoped, tag = 'input window, operand 3']
    #allocation6 [shape = 's32[2]{0}', space=sflag, size = 0x8, scoped, tag = 'scoped memory for _forward.1']
    #allocation7 [shape = 'u8[24576]{0}', space=vmem, size = 0x6000, scoped, tag = 'output window, operand 0']
    %20 = vsyncpa [#allocation6], 0
    %s21 = scalar_lea.sflag [#allocation6], 1
    %22 = vsyncpa %s21, 0
    loop: start=0, step=1, limit=5
    $region2: #{_forward.1} parent=1 // loop_pre_header
      _
    $region3: #{_forward.1} parent=1 // loop_header
      %s24 = sphi 0, %s28
      %p25 = scmp.ge.s32.totalorder %s24, 5
      %s31 = sphi 0, %s50
      %s32 = sphi 0, %s46
      %s33 = sphi 0, %s42
      %s34 = sphi 0, %s31
      %s35 = sphi 0, %s32
      %s36 = sphi 0, %s33
      %s37 = sphi 0, %s34
      %s38 = sphi 0, %s35
      %s39 = sphi 0, %s36
      %s71 = sphi 0, %s73
      %s74 = sphi 0, %s71
      %s75 = sphi 0, %s74
      %s91 = sphi 0, %s75
      %s115 = sphi 0, %s117
      %s118 = sphi 0, %s115
      %s119 = sphi 0, %s118
      %s135 = sphi 0, %s119
      %s141 = sphi 0, %s143
      %s144 = sphi 0, %s141
      %s145 = sphi 0, %s144
      %s161 = sphi 0, %s145
      %s169 = sphi 0, %s171
      %s172 = sphi 0, %s169
      %s173 = sphi 0, %s172
      %s189 = sphi 0, %s173
    $region4: #{_forward.1} parent=1 // loop_header_branch
      %27 = sbr.rel (%p25) target = $region8
    $region5: #{_forward.1} parent=1 // loop_body
      %s29 = ssub.s32 %s24, 1
      %s30 = ssub.s32 %s24, 2
      %s40 = sadd.s32 1, %s33
      %p41 = scmp.ge.s32.totalorder %s40, 1
      %s42 = scalar_select %p41, 0, %s40
      %s43 = sadd.s32 1, %s32
      %s44 = scalar_select %p41, %s43, %s32
      %p45 = scmp.ge.s32.totalorder %s44, 3
      %s46 = scalar_select %p45, 0, %s44
      %s47 = sadd.s32 1, %s31
      %s48 = scalar_select %p45, %s47, %s31
      %p49 = scmp.ge.s32.totalorder %s48, 1
      %s50 = scalar_select %p49, 0, %s48
      %s51 = sshra.s32 %s33, 7
      %s52 = sand.u32 %s33, 127
      %s53 = sadd.s32 %s51, %s32
      %s54 = smul.u32 %s53, 128
      %s55 = sshra.s32 %s33, 7
      %s56 = sand.u32 %s33, 127
      %s57 = sadd.s32 %s54, %s56
      %s58 = sld [smem:[#allocation3 + %s57]]
      %s59 = sshra.s32 %s42, 7
      %s60 = sand.u32 %s42, 127
      %s61 = sadd.s32 %s59, %s46
      %s62 = smul.u32 %s61, 128
      %s63 = sshra.s32 %s42, 7
      %s64 = sand.u32 %s42, 127
      %s65 = sadd.s32 %s62, %s64
      %s66 = sld [smem:[#allocation3 + %s65]]
      %s67 = ssub.s32 %s31, %s50
      %s68 = ssub.s32 %s58, %s66
      %s69 = sor.u32 %s67, %s68
      %p70 = scmp.eq.s32.totalorder %s69, 0
      %s72 = sadd.s32 %s71, 1
      %s73 = scalar_select %p70, %s71, %s72
      %p76 = pneg %p70
      %p77 = scmp.eq.s32.totalorder %s24, 2
      %p78 = por %p76, %p77
      %p79 = scmp.ne.s32.totalorder %s71, %s74
      %p80 = scmp.eq.s32.totalorder %s24, 0
      %p81 = por %p79, %p80
      %p82 = scmp.ne.s32.totalorder %s71, %s74
      %p83 = scmp.eq.s32.totalorder %s29, 2
      %p84 = por %p82, %p83
      %p85 = scmp.ne.s32.totalorder %s74, %s75
      %p86 = scmp.eq.s32.totalorder %s29, 0
      %p87 = por %p85, %p86
      %p88 = scmp.ne.s32.totalorder %s74, %s75
      %p89 = scmp.eq.s32.totalorder %s30, 2
      %p90 = por %p88, %p89
      %p92 = scmp.ne.s32.totalorder %s75, %s91
      %p93 = scmp.eq.s32.totalorder %s30, 0
      %p94 = por %p92, %p93
      %s95 = sshra.s32 %s33, 7
      %s96 = sand.u32 %s33, 127
      %s97 = sadd.s32 %s95, %s32
      %s98 = smul.u32 %s97, 128
      %s99 = sshra.s32 %s33, 7
      %s100 = sand.u32 %s33, 127
      %s101 = sadd.s32 %s98, %s100
      %s102 = sld [smem:[#allocation3 + %s101]]
      %s103 = sshra.s32 %s42, 7
      %s104 = sand.u32 %s42, 127
      %s105 = sadd.s32 %s103, %s46
      %s106 = smul.u32 %s105, 128
      %s107 = sshra.s32 %s42, 7
      %s108 = sand.u32 %s42, 127
      %s109 = sadd.s32 %s106, %s108
      %s110 = sld [smem:[#allocation3 + %s109]]
      %s111 = ssub.s32 %s102, %s110
      %s112 = ssub.s32 %s32, %s46
      %s113 = sor.u32 %s111, %s112
      %p114 = scmp.eq.s32.totalorder %s113, 0
      %s116 = sadd.s32 %s115, 1
      %s117 = scalar_select %p114, %s115, %s116
      %p120 = pneg %p114
      %p121 = scmp.eq.s32.totalorder %s24, 2
      %p122 = por %p120, %p121
      %p123 = scmp.ne.s32.totalorder %s115, %s118
      %p124 = scmp.eq.s32.totalorder %s24, 0
      %p125 = por %p123, %p124
      %p126 = scmp.ne.s32.totalorder %s115, %s118
      %p127 = scmp.eq.s32.totalorder %s29, 2
      %p128 = por %p126, %p127
      %p129 = scmp.ne.s32.totalorder %s118, %s119
      %p130 = scmp.eq.s32.totalorder %s29, 0
      %p131 = por %p129, %p130
      %p132 = scmp.ne.s32.totalorder %s118, %s119
      %p133 = scmp.eq.s32.totalorder %s30, 2
      %p134 = por %p132, %p133
      %p136 = scmp.ne.s32.totalorder %s119, %s135
      %p137 = scmp.eq.s32.totalorder %s30, 0
      %p138 = por %p136, %p137
      %s139 = ssub.s32 %s32, %s46
      %p140 = scmp.eq.s32.totalorder %s139, 0
      %s142 = sadd.s32 %s141, 1
      %s143 = scalar_select %p140, %s141, %s142
      %p146 = pneg %p140
      %p147 = scmp.eq.s32.totalorder %s24, 2
      %p148 = por %p146, %p147
      %p149 = scmp.ne.s32.totalorder %s141, %s144
      %p150 = scmp.eq.s32.totalorder %s24, 0
      %p151 = por %p149, %p150
      %p152 = scmp.ne.s32.totalorder %s141, %s144
      %p153 = scmp.eq.s32.totalorder %s29, 2
      %p154 = por %p152, %p153
      %p155 = scmp.ne.s32.totalorder %s144, %s145
      %p156 = scmp.eq.s32.totalorder %s29, 0
      %p157 = por %p155, %p156
      %p158 = scmp.ne.s32.totalorder %s144, %s145
      %p159 = scmp.eq.s32.totalorder %s30, 2
      %p160 = por %p158, %p159
      %p162 = scmp.ne.s32.totalorder %s145, %s161
      %p163 = scmp.eq.s32.totalorder %s30, 0
      %p164 = por %p162, %p163
      %s165 = ssub.s32 %s31, %s50
      %s166 = ssub.s32 %s32, %s46
      %s167 = sor.u32 %s165, %s166
      %p168 = scmp.eq.s32.totalorder %s167, 0
      %s170 = sadd.s32 %s169, 1
      %s171 = scalar_select %p168, %s169, %s170
      %p174 = pneg %p168
      %p175 = scmp.eq.s32.totalorder %s24, 2
      %p176 = por %p174, %p175
      %p177 = scmp.ne.s32.totalorder %s169, %s172
      %p178 = scmp.eq.s32.totalorder %s24, 0
      %p179 = por %p177, %p178
      %p180 = scmp.ne.s32.totalorder %s169, %s172
      %p181 = scmp.eq.s32.totalorder %s29, 2
      %p182 = por %p180, %p181
      %p183 = scmp.ne.s32.totalorder %s172, %s173
      %p184 = scmp.eq.s32.totalorder %s29, 0
      %p185 = por %p183, %p184
      %p186 = scmp.ne.s32.totalorder %s172, %s173
      %p187 = scmp.eq.s32.totalorder %s30, 2
      %p188 = por %p186, %p187
      %p190 = scmp.ne.s32.totalorder %s173, %s189
      %p191 = scmp.eq.s32.totalorder %s30, 0
      %p192 = por %p190, %p191
      %p193 = scmp.le.s32.totalorder 1, %s24
      %p194 = scmp.lt.s32.totalorder %s24, 4
      %p195 = pnand %p193, %p194
      %p196 = pneg %p195
      // Predicated region
      $region9: #{_forward.1} parent=5 // pred_check
        _
      $region10: #{_forward.1} parent=5 // pred_check_branch
        %198 = sbr.rel (%p195) target = $region12
      $region11: #{_forward.1} parent=5 // pred_region
        %s199 = ssub.s32 %s24, 1
      $region12: #{_forward.1} parent=5 // pred_fallthru
        _
      %p200 = scmp.lt.s32.totalorder %s24, 3
      // Predicated region
      $region13: #{_forward.1} parent=5 // pred_check
        %p201 = pneg %p200
      $region14: #{_forward.1} parent=5 // pred_check_branch
        %203 = sbr.rel (%p201) target = $region16
      $region15: #{_forward.1} parent=5 // pred_region
        // Predicated region
        $region17: #{_forward.1} parent=15 // pred_check
          %p204 = pneg %p81
        $region18: #{_forward.1} parent=15 // pred_check_branch
          %206 = sbr.rel (%p204) target = $region20
        $region19: #{_forward.1} parent=15 // pred_region
          %s207 = sshra.s32 %s33, 7
          %s208 = sand.u32 %s33, 127
          %s209 = sadd.s32 %s207, %s32
          %s210 = smul.u32 %s209, 128
          %s211 = sshra.s32 %s33, 7
          %s212 = sand.u32 %s33, 127
          %s213 = sadd.s32 %s210, %s212
          %s214 = sld [smem:[#allocation3 + %s213]]
          %s215 = smul.u32 3, %s31
          %s216 = smul.u32 2, %s214
          %p217 = scmp.lt.s32.totalorder %s215, 2
          %s218 = scalar_select %p217, %s215, 2
          %p219 = scmp.lt.s32.totalorder %s216, 1
          %s220 = scalar_select %p219, %s216, 1
          %s221 = smul.addr %s218, 2
          %s222 = sadd.s32 %s220, %s221
          %s223 = smul.addr %s222, 8
          %s224 = scalar_lea.vmem %s2, %s223
          %s225 = sshra.s32 %s33, 7
          %s226 = sand.u32 %s33, 127
          %s227 = sadd.s32 %s225, %s32
          %s228 = smul.u32 %s227, 128
          %s229 = sshra.s32 %s33, 7
          %s230 = sand.u32 %s33, 127
          %s231 = sadd.s32 %s228, %s230
          %s232 = sld [smem:[#allocation3 + %s231]]
          %s233 = smul.u32 3, %s31
          %s234 = smul.u32 2, %s232
        $region20: #{_forward.1} parent=15 // pred_fallthru
          _
        // Predicated region
        $region21: #{_forward.1} parent=15 // pred_check
          %p235 = pneg %p125
        $region22: #{_forward.1} parent=15 // pred_check_branch
          %237 = sbr.rel (%p235) target = $region24
        $region23: #{_forward.1} parent=15 // pred_region
          %s238 = sand.u32 %s115, 1
          %s239 = scalar_lea.sflag [#allocation6], %s238
          %s240 = sand.u32 %s115, 1
          %s241 = smul.addr %s240, 256
          %s242 = scalar_lea.vmem [#allocation5], %s241
          %s243 = sshra.s32 %s33, 7
          %s244 = sand.u32 %s33, 127
          %s245 = sadd.s32 %s243, %s32
          %s246 = smul.u32 %s245, 128
          %s247 = sshra.s32 %s33, 7
          %s248 = sand.u32 %s33, 127
          %s249 = sadd.s32 %s246, %s248
          %s250 = sld [smem:[#allocation3 + %s249]]
          %s251 = smul.u32 32, %s250
          %s253 = ssub.s32 4096, 4096
          %254 = vsyncadd %s239, %s253
          %s255 = smul.addr %s251, 3
          %s256 = sadd.s32 %s32, %s255
          %s257 = smul.addr %s256, 128
          %s258 = scalar_lea.hbm %s3, %s257
          %s259 = sshll.u32 %s242, 4
          %s260 = int_to_ptr.vmem [resolvable:$true] %s259
          %265 = dma.hbm_to_vmem [thread:$0]  %s258, 4096, %s260, %s239, 384, 128, 8
        $region24: #{_forward.1} parent=15 // pred_fallthru
          _
        // Predicated region
        $region25: #{_forward.1} parent=15 // pred_check
          %p266 = pneg %p151
        $region26: #{_forward.1} parent=15 // pred_check_branch
          %268 = sbr.rel (%p266) target = $region28
        $region27: #{_forward.1} parent=15 // pred_region
          %p269 = scmp.lt.s32.totalorder %s32, 2
          %s270 = scalar_select %p269, %s32, 2
          %s271 = scalar_lea.vmem %s4, %s270
        $region28: #{_forward.1} parent=15 // pred_fallthru
          _
      $region16: #{_forward.1} parent=5 // pred_fallthru
        _
      %p272 = scmp.le.s32.totalorder 1, %s24
      %p273 = scmp.lt.s32.totalorder %s24, 4
      %p274 = pnand %p272, %p273
      %p275 = pneg %p274
      // Predicated region
      $region29: #{_forward.1} parent=5 // pred_check
        _
      $region30: #{_forward.1} parent=5 // pred_check_branch
        %277 = sbr.rel (%p274) target = $region32
      $region31: #{_forward.1} parent=5 // pred_region
        %s278 = ssub.s32 %s24, 1
        %s279 = sand.u32 %s118, 1
        %s280 = scalar_lea.sflag [#allocation6], %s279
        %s281 = sand.u32 %s118, 1
        %s282 = smul.addr %s281, 256
        %s283 = scalar_lea.vmem [#allocation5], %s282
        // Predicated region
        $region33: #{_forward.1} parent=31 // pred_check
          %p284 = pneg %p131
        $region34: #{_forward.1} parent=31 // pred_check_branch
          %286 = sbr.rel (%p284) target = $region36
        $region35: #{_forward.1} parent=31 // pred_region
          %287 = dma.done %s280, 4096
        $region36: #{_forward.1} parent=31 // pred_fallthru
          _
        %s288 = sshra.s32 %s36, 7
        %s289 = sand.u32 %s36, 127
        %s290 = sadd.s32 %s288, %s35
        %s291 = smul.u32 %s290, 128
        %s292 = sshra.s32 %s36, 7
        %s293 = sand.u32 %s36, 127
        %s294 = sadd.s32 %s291, %s293
        %s295 = sld [smem:[#allocation3 + %s294]]
        %s296 = smul.u32 3, %s34
        %s297 = smul.u32 2, %s295
        %p298 = scmp.lt.s32.totalorder %s296, 2
        %s299 = scalar_select %p298, %s296, 2
        %p300 = scmp.lt.s32.totalorder %s297, 1
        %s301 = scalar_select %p300, %s297, 1
        %s302 = smul.addr %s299, 2
        %s303 = sadd.s32 %s301, %s302
        %s304 = smul.addr %s303, 8
        %s305 = scalar_lea.vmem %s2, %s304
        %p306 = pneg %p87
        %p307 = pneg %p84
        %s308 = sand.u32 %s118, 1
        %s309 = scalar_lea.sflag [#allocation6], %s308
        %s310 = sand.u32 %s118, 1
        %s311 = smul.addr %s310, 256
        %s312 = scalar_lea.vmem [#allocation5], %s311
        %p313 = pneg %p131
        %p314 = pneg %p128
        %p315 = scmp.lt.s32.totalorder %s35, 2
        %s316 = scalar_select %p315, %s35, 2
        %s317 = scalar_lea.vmem %s4, %s316
        %p318 = pneg %p157
        %p319 = pneg %p154
        %p320 = pneg %p185
        %p321 = pneg %p182
        %s322 = sand.u32 %s172, 1
        %s323 = sand.u32 %s172, 1
        %s324 = smul.addr %s323, 24
        %s325 = scalar_lea.vmem [#allocation7], %s324
        %s326 = sshra.s32 %s36, 7
        %s327 = sand.u32 %s36, 127
        %s328 = sadd.s32 %s326, %s35
        %s329 = smul.u32 %s328, 128
        %s330 = sshra.s32 %s36, 7
        %s331 = sand.u32 %s36, 127
        %s332 = sadd.s32 %s329, %s331
        %s333 = sld [smem:[#allocation3 + %s332]]
        %s334 = smul.u32 3, %s34
        %s335 = smul.u32 2, %s333
        %p336 = scmp.lt.s32.totalorder %s334, 2
        %s337 = scalar_select %p336, %s334, 2
        %p338 = scmp.lt.s32.totalorder %s335, 1
        %s339 = scalar_select %p338, %s335, 1
        %s340 = smul.addr %s337, 2
        %s341 = sadd.s32 %s339, %s340
        %s342 = smul.addr %s341, 8
        %s343 = scalar_lea.vmem %s2, %s342
        %s344 = sshra.s32 %s36, 7
        %s345 = sand.u32 %s36, 127
        %s346 = sadd.s32 %s344, %s35
        %s347 = smul.u32 %s346, 128
        %s348 = sshra.s32 %s36, 7
        %s349 = sand.u32 %s36, 127
        %s350 = sadd.s32 %s347, %s349
        %s351 = sld [smem:[#allocation3 + %s350]]
        %s352 = smul.u32 3, %s34
        %s353 = smul.u32 2, %s351
        %s354 = sshra.s32 %s36, 7
        %s355 = sand.u32 %s36, 127
        %s356 = sadd.s32 %s354, %s35
        %s357 = smul.u32 %s356, 128
        %s358 = sshra.s32 %s36, 7
        %s359 = sand.u32 %s36, 127
        %s360 = sadd.s32 %s357, %s359
        %s361 = sld [smem:[#allocation3 + %s360]]
        %s362 = smul.u32 32, %s361
        %p363 = scmp.lt.s32.totalorder %s35, 2
        %s364 = scalar_select %p363, %s35, 2
        %s365 = scalar_lea.vmem %s4, %s364
        %s366 = smul.u32 3, %s34
        %p367 = scmp.eq.s32.totalorder %s36, 0
        // Predicated region
        $region37: #{_forward.1} parent=31 // pred_check
          %p368 = pneg %p367
        $region38: #{_forward.1} parent=31 // pred_check_branch
          %370 = sbr.rel (%p368) target = $region40
        $region39: #{_forward.1} parent=31 // pred_region
          %v371 = vld [vmem:[%s365] sm:$0x1]
          %v373 = vlaneseq
          %v374 = vshrl.u32 %v373, 7
          %v375 = vsub.s32 0, %v374
          %v376 = vrot.slane %v371, %v375
          %378 = vst [vmem:[%s325] sm:$0xff] %v376
          %379 = vst [vmem:[%s325 + $0x8] sm:$0xff] %v376
          %380 = vst [vmem:[%s325 + $0x10] sm:$0xff] %v376
        $region40: #{_forward.1} parent=31 // pred_fallthru
          _
        %s381 = sld [smem:[#allocation4 + %s35]]
        %p382 = scmp.lt.s32.totalorder %s36, %s381
        // Predicated region
        $region41: #{_forward.1} parent=31 // pred_check
          %p383 = pneg %p382
        $region42: #{_forward.1} parent=31 // pred_check_branch
          %385 = sbr.rel (%p383) target = $region44
        $region43: #{_forward.1} parent=31 // pred_region
          %v386 = vld [vmem:[%s325] sm:$0xff]
          %v387 = vld [vmem:[%s325 + $0x8] sm:$0xff]
          %v388 = vld [vmem:[%s325 + $0x10] sm:$0xff]
          %v389 = vld [vmem:[%s343] sm:$0xff]
          %v390 = vld [vmem:[%s343 + $0x8] sm:$0xff]
          %v391 = vld [vmem:[%s343 + $0x10] sm:$0xff]
          %v392 = vld [vmem:[%s343 + $0x18] sm:$0xff]
          %v393 = vld [vmem:[%s343 + $0x20] sm:$0xff]
          %v394 = vld [vmem:[%s343 + $0x28] sm:$0xff]
          %v395 = vld [vmem:[%s283] sm:$0xff]
          %v396 = vld [vmem:[%s283 + $0x8] sm:$0xff]
          %v397 = vld [vmem:[%s283 + $0x10] sm:$0xff]
          %v398 = vld [vmem:[%s283 + $0x18] sm:$0xff]
          %v399 = vld [vmem:[%s283 + $0x20] sm:$0xff]
          %v400 = vld [vmem:[%s283 + $0x28] sm:$0xff]
          %v401 = vld [vmem:[%s283 + $0x30] sm:$0xff]
          %v402 = vld [vmem:[%s283 + $0x38] sm:$0xff]
          %v403 = vld [vmem:[%s283 + $0x40] sm:$0xff]
          %v404 = vld [vmem:[%s283 + $0x48] sm:$0xff]
          %v405 = vld [vmem:[%s283 + $0x50] sm:$0xff]
          %v406 = vld [vmem:[%s283 + $0x58] sm:$0xff]
          %v407 = vld [vmem:[%s283 + $0x60] sm:$0xff]
          %v408 = vld [vmem:[%s283 + $0x68] sm:$0xff]
          %v409 = vld [vmem:[%s283 + $0x70] sm:$0xff]
          %v410 = vld [vmem:[%s283 + $0x78] sm:$0xff]
          %v411 = vld [vmem:[%s283 + $0x80] sm:$0xff]
          %v412 = vld [vmem:[%s283 + $0x88] sm:$0xff]
          %v413 = vld [vmem:[%s283 + $0x90] sm:$0xff]
          %v414 = vld [vmem:[%s283 + $0x98] sm:$0xff]
          %v415 = vld [vmem:[%s283 + $0xa0] sm:$0xff]
          %v416 = vld [vmem:[%s283 + $0xa8] sm:$0xff]
          %v417 = vld [vmem:[%s283 + $0xb0] sm:$0xff]
          %v418 = vld [vmem:[%s283 + $0xb8] sm:$0xff]
          %v419 = vld [vmem:[%s283 + $0xc0] sm:$0xff]
          %v420 = vld [vmem:[%s283 + $0xc8] sm:$0xff]
          %v421 = vld [vmem:[%s283 + $0xd0] sm:$0xff]
          %v422 = vld [vmem:[%s283 + $0xd8] sm:$0xff]
          %v423 = vld [vmem:[%s283 + $0xe0] sm:$0xff]
          %v424 = vld [vmem:[%s283 + $0xe8] sm:$0xff]
          %v425 = vld [vmem:[%s283 + $0xf0] sm:$0xff]
          %v426 = vld [vmem:[%s283 + $0xf8] sm:$0xff]
          %427 = vmatprep.subr.mxu0 0.0
          %428 = vmatpush1.msra.mxu0 %v395
          %429 = vmatprep.subr.mxu0 0.0
          %430 = vmatpush1.msra.mxu0 %v396
          %431 = vmatprep.subr.mxu0 0.0
          %432 = vmatpush1.msra.mxu0 %v397
          %433 = vmatprep.subr.mxu0 0.0
          %434 = vmatpush1.msra.mxu0 %v398
          %435 = vmatprep.subr.mxu0 0.0
          %436 = vmatpush1.msra.mxu0 %v399
          %437 = vmatprep.subr.mxu0 0.0
          %438 = vmatpush1.msra.mxu0 %v400
          %439 = vmatprep.subr.mxu0 0.0
          %440 = vmatpush1.msra.mxu0 %v401
          %441 = vmatprep.subr.mxu0 0.0
          %442 = vmatpush1.msra.mxu0 %v402
          %443 = vmatprep.subr.mxu0 0.0
          %444 = vmatpush1.msra.mxu0 %v403
          %445 = vmatprep.subr.mxu0 0.0
          %446 = vmatpush1.msra.mxu0 %v404
          %447 = vmatprep.subr.mxu0 0.0
          %448 = vmatpush1.msra.mxu0 %v405
          %449 = vmatprep.subr.mxu0 0.0
          %450 = vmatpush1.msra.mxu0 %v406
          %451 = vmatprep.subr.mxu0 0.0
          %452 = vmatpush1.msra.mxu0 %v407
          %453 = vmatprep.subr.mxu0 0.0
          %454 = vmatpush1.msra.mxu0 %v408
          %455 = vmatprep.subr.mxu0 0.0
          %456 = vmatpush1.msra.mxu0 %v409
          %457 = vmatprep.subr.mxu0 0.0
          %458 = vmatpush1.msra.mxu0 %v410
          %459 = vmatprep.subr.mxu0 0.0
          %460 = vmatpush1.msra.mxu0 %v411
          %461 = vmatprep.subr.mxu0 0.0
          %462 = vmatpush1.msra.mxu0 %v412
          %463 = vmatprep.subr.mxu0 0.0
          %464 = vmatpush1.msra.mxu0 %v413
          %465 = vmatprep.subr.mxu0 0.0
          %466 = vmatpush1.msra.mxu0 %v414
          %467 = vmatprep.subr.mxu0 0.0
          %468 = vmatpush1.msra.mxu0 %v415
          %469 = vmatprep.subr.mxu0 0.0
          %470 = vmatpush1.msra.mxu0 %v416
          %471 = vmatprep.subr.mxu0 0.0
          %472 = vmatpush1.msra.mxu0 %v417
          %473 = vmatprep.subr.mxu0 0.0
          %474 = vmatpush1.msra.mxu0 %v418
          %475 = vmatprep.subr.mxu0 0.0
          %476 = vmatpush1.msra.mxu0 %v419
          %477 = vmatprep.subr.mxu0 0.0
          %478 = vmatpush1.msra.mxu0 %v420
          %479 = vmatprep.subr.mxu0 0.0
          %480 = vmatpush1.msra.mxu0 %v421
          %481 = vmatprep.subr.mxu0 0.0
          %482 = vmatpush1.msra.mxu0 %v422
          %483 = vmatprep.subr.mxu0 0.0
          %484 = vmatpush1.msra.mxu0 %v423
          %485 = vmatprep.subr.mxu0 0.0
          %486 = vmatpush1.msra.mxu0 %v424
          %487 = vmatprep.subr.mxu0 0.0
          %488 = vmatpush1.msra.mxu0 %v425
          %489 = vmatprep.subr.mxu0 0.0
          %490 = vmatpush1.msra.mxu0 %v426
          %491 = vmatprep.mubr.f32.mxu0 %v390
          %492 = vmatmul.mubr.f32.gmra.mrb[0].mxu0 %v389
          %v493 = vpop.f32.mrb[0].mxu0
          %v494 = vadd.f32 0.0, %v493
          %v495 = vpop.f32.mrb[0].mxu0
          %496 = vmatprep.mubr.f32.mxu0 %v392
          %497 = vmatmul.mubr.f32.gmra.mrb[0].mxu0 %v391
          %v498 = vpop.f32.mrb[0].mxu0
          %v499 = vadd.f32 0.0, %v498
          %v500 = vpop.f32.mrb[0].mxu0
          %501 = vmatprep.mubr.f32.mxu0 %v394
          %502 = vmatmul.mubr.f32.gmra.mrb[0].mxu0 %v393
          %v503 = vpop.f32.mrb[0].mxu0
          %v504 = vadd.f32 0.0, %v503
          %v505 = vpop.f32.mrb[0].mxu0
          %506 = vdwg.mxu0
          %v507 = vadd.f32 %v386, %v494
          %v508 = vadd.f32 %v387, %v499
          %v509 = vadd.f32 %v388, %v504
          %510 = vst [vmem:[%s325] sm:$0xff] %v507
          %511 = vst [vmem:[%s325 + $0x8] sm:$0xff] %v508
          %512 = vst [vmem:[%s325 + $0x10] sm:$0xff] %v509
        $region44: #{_forward.1} parent=31 // pred_fallthru
          _
        %s513 = sand.u32 %s172, 1
        %s514 = sand.u32 %s172, 1
        %s515 = smul.addr %s514, 24
        %s516 = scalar_lea.vmem [#allocation7], %s515
        // Predicated region
        $region45: #{_forward.1} parent=31 // pred_check
          %p517 = pneg %p182
        $region46: #{_forward.1} parent=31 // pred_check_branch
          %519 = sbr.rel (%p517) target = $region48
        $region47: #{_forward.1} parent=31 // pred_region
          %s520 = smul.u32 3, %s34
          %s521 = smul.addr %s520, 3
          %s522 = sadd.s32 %s35, %s521
          %s523 = smul.addr %s522, 8
          %s524 = scalar_lea.vmem %s5, %s523
          // Predicated region
          $region49: #{_forward.1} parent=47 // pred_check
            _
          $region50: #{_forward.1} parent=47 // pred_check_branch
            %526 = sbr.rel (0) target = $region52
          $region51: #{_forward.1} parent=47 // pred_region
            // Predicated region
            $region53: #{_forward.1} parent=51 // pred_check
              _
            $region54: #{_forward.1} parent=51 // pred_check_branch
              %528 = sbr.rel (0) target = $region56
            $region55: #{_forward.1} parent=51 // pred_region
              // Predicated region
              $region68: #{_forward.1} parent=55 // pred_check
                _
              $region69: #{_forward.1} parent=55 // pred_check_branch
                %547 = sbr.rel (0) target = $region71
              $region70: #{_forward.1} parent=55 // pred_region
                loop: start=0, step=1, limit=1
                $region72: #{_forward.1} parent=70 // loop_pre_header
                  _
                $region73: #{_forward.1} parent=70 // loop_header
                  %s549 = sphi 0, %s553
                  %p550 = scmp.ge.s32.totalorder %s549, 1
                  %s554 = sphi %s516, %s516
                  %s555 = sphi %s524, %s524
                $region74: #{_forward.1} parent=70 // loop_header_branch
                  %552 = sbr.rel (%p550) target = $region78
                $region75: #{_forward.1} parent=70 // loop_body
                  %v556 = vld [vmem:[%s554] sm:$0xff]
                  %557 = vst [vmem:[%s555] sm:$0xff] %v556
                  %v558 = vld [vmem:[%s554 + $0x8] sm:$0xff]
                  %559 = vst [vmem:[%s555 + $0x18] sm:$0xff] %v558
                  %v560 = vld [vmem:[%s554 + $0x10] sm:$0xff]
                  %561 = vst [vmem:[%s555 + $0x30] sm:$0xff] %v560
                $region76: #{_forward.1} parent=70 // loop_footer
                  %s553 = sadd.s32 1, %s549
                $region77: #{_forward.1} parent=70 // loop_footer_branch
                  %548 = sbr.rel target = $region73
                $region78: #{_forward.1} parent=70 // loop_exit
                  _
              $region71: #{_forward.1} parent=55 // pred_fallthru
                _
              // Predicated region
              $region79: #{_forward.1} parent=55 // pred_check
                _
              $region80: #{_forward.1} parent=55 // pred_check_branch
                %563 = sbr.rel target = $region82
              $region81: #{_forward.1} parent=55 // pred_region
                _
              $region82: #{_forward.1} parent=55 // pred_fallthru
                _
            $region56: #{_forward.1} parent=51 // pred_fallthru
              _
            // Predicated region
            $region57: #{_forward.1} parent=51 // pred_check
              _
            $region58: #{_forward.1} parent=51 // pred_check_branch
              %530 = sbr.rel target = $region60
            $region59: #{_forward.1} parent=51 // pred_region
              loop: start=0, step=1, limit=1
              $region61: #{_forward.1} parent=59 // loop_pre_header
                _
              $region62: #{_forward.1} parent=59 // loop_header
                %s533 = sphi 0, %s537
                %p534 = scmp.ge.s32.totalorder %s533, 1
                %s538 = sphi %s516, %s516
                %s539 = sphi %s524, %s524
              $region63: #{_forward.1} parent=59 // loop_header_branch
                %536 = sbr.rel (%p534) target = $region67
              $region64: #{_forward.1} parent=59 // loop_body
                %v540 = vld [vmem:[%s538] sm:$0xff]
                %541 = vst [vmem:[%s539] sm:$0xff] %v540
                %v542 = vld [vmem:[%s538 + $0x8] sm:$0xff]
                %543 = vst [vmem:[%s539 + $0x18] sm:$0xff] %v542
                %v544 = vld [vmem:[%s538 + $0x10] sm:$0xff]
                %545 = vst [vmem:[%s539 + $0x30] sm:$0xff] %v544
              $region65: #{_forward.1} parent=59 // loop_footer
                %s537 = sadd.s32 1, %s533
              $region66: #{_forward.1} parent=59 // loop_footer_branch
                %532 = sbr.rel target = $region62
              $region67: #{_forward.1} parent=59 // loop_exit
                _
            $region60: #{_forward.1} parent=51 // pred_fallthru
              _
          $region52: #{_forward.1} parent=47 // pred_fallthru
            _
          %564 = vnop
        $region48: #{_forward.1} parent=31 // pred_fallthru
          _
      $region32: #{_forward.1} parent=5 // pred_fallthru
        _
      %p565 = scmp.le.s32.totalorder 2, %s24
      // Predicated region
      $region83: #{_forward.1} parent=5 // pred_check
        %p566 = pneg %p565
      $region84: #{_forward.1} parent=5 // pred_check_branch
        %568 = sbr.rel (%p566) target = $region86
      $region85: #{_forward.1} parent=5 // pred_region
        %s569 = ssub.s32 %s24, 2
        // Predicated region
        $region87: #{_forward.1} parent=85 // pred_check
          %p570 = pneg %p188
        $region88: #{_forward.1} parent=85 // pred_check_branch
          %572 = sbr.rel (%p570) target = $region90
        $region89: #{_forward.1} parent=85 // pred_region
          %s573 = sand.u32 %s173, 1
          %s574 = sand.u32 %s173, 1
          %s575 = smul.addr %s574, 24
          %s576 = scalar_lea.vmem [#allocation7], %s575
        $region90: #{_forward.1} parent=85 // pred_fallthru
          _
      $region86: #{_forward.1} parent=5 // pred_fallthru
        _
    $region6: #{_forward.1} parent=1 // loop_footer
      %s28 = sadd.s32 1, %s24
    $region7: #{_forward.1} parent=1 // loop_footer_branch
      %23 = sbr.rel target = $region3
    $region8: #{_forward.1} parent=1 // loop_exit
      _
    %577 = vsyncpa [#allocation6], 1
    %s578 = scalar_lea.sflag [#allocation6], 1
    %579 = vsyncpa %s578, 1

</llo_original>
